<compile_context>
chip_gen: v7x
topology: tpu7x:2x2x1
jax: 0.10.0
libtpu: 0.0.40
codegen_flags: <defaults>
</compile_context>

<pallas_src>
from functools import partial

import jax
import jax.numpy as jnp
from jax.experimental import pallas as pl
from jax.experimental.pallas import tpu as pltpu


def _round_up(x: int, m: int) -> int:
    return (x + m - 1) // m * m


def _padded_vmem_bytes(shape, dtype) -> int:
    """VMEM footprint of one buffer, honoring 128-lane / sublane padding."""
    itemsize = jnp.dtype(dtype).itemsize
    sub_mult = 8 * max(1, 4 // itemsize)        # 8 (f32), 16 (bf16), 32 (int8)
    dims = list(shape)
    if len(dims) == 1:
        dims = [1] + dims
    dims[-1] = _round_up(dims[-1], 128)
    dims[-2] = _round_up(dims[-2], sub_mult)
    total = itemsize
    for d in dims:
        total *= d
    return total


def _default_vmem_budget_bytes() -> int:
    try:
        kind = jax.devices()[0].device_kind.lower()
    except Exception:
        kind = ""
    # v5e / v5p / v6e have 128 MiB physical VMEM; be conservative elsewhere
    # (v7x has only 64 MiB physical, 32 MiB scoped default).
    if "v5" in kind or "v6" in kind:
        return 88 * 1024 * 1024
    return 40 * 1024 * 1024


def _biaffine_kernel(x1_ref, x2w_ref, bias_ref, o_ref):
    # x1_ref  : (1, TL1, D1r)      bias-augmented / K-padded input1 tile
    # x2w_ref : (1, D1r, TN)       precontracted W @ x2' slab (resident per (b,n))
    # bias_ref: (1, 1, TN)         f32 bias row, bias_row[j*O + o] = bias[o]
    # o_ref   : (1, TL1, TN)       output tile in flattened (L1, L2*O) layout
    acc = jnp.dot(x1_ref[0], x2w_ref[0], preferred_element_type=jnp.float32)
    o_ref[0] = (acc + bias_ref[0]).astype(o_ref.dtype)


def biaffine_forward(input1, input2, weight, bias, *,
                     compute_dtype=jnp.float32,
                     out_dtype=None,
                     block_l1=None,
                     block_n=None,
                     vmem_budget_bytes=None):
    """Biaffine forward with bias flags (True, True, True); returns (B,L1,L2,O)."""
    B, L1, D1 = input1.shape
    B2, L2, D2 = input2.shape
    assert B == B2
    D1p, D2p, O = weight.shape
    assert D1p == D1 + 1 and D2p == D2 + 1

    if out_dtype is None:
        out_dtype = input1.dtype
    out_dtype = jnp.dtype(out_dtype)
    compute_dtype = jnp.dtype(compute_dtype)
    if vmem_budget_bytes is None:
        vmem_budget_bytes = _default_vmem_budget_bytes()

    # K dim (feature dim of x1') padded to the sublane multiple of compute_dtype.
    sub_mult = 16 if compute_dtype.itemsize == 2 else 8
    D1r = _round_up(D1p, sub_mult)
    NO = L2 * O                                   # flattened output lane dim

    # ---- operand preparation (all cheap relative to the main matmul) --------
    # x1' = [input1 | 1], zero-padded on K (padded K rows of x2w are also zero).
    x1p = jnp.concatenate([input1, jnp.ones((B, L1, 1), input1.dtype)], axis=2)
    if D1r > D1p:
        x1p = jnp.pad(x1p, ((0, 0), (0, 0), (0, D1r - D1p)))
    x1p = x1p.astype(compute_dtype)

    # Precontraction: x2w[b, p, j*O + o] = sum_q W[p, q, o] * x2'[b, j, q].
    x2p = jnp.concatenate([input2, jnp.ones((B, L2, 1), input2.dtype)], axis=2)
    x2w = jnp.einsum("bjq,pqo->bpjo", x2p, weight,
                     precision=jax.lax.Precision.HIGHEST)
    x2w = x2w.reshape(B, D1p, NO)
    if D1r > D1p:
        x2w = jnp.pad(x2w, ((0, 0), (0, D1r - D1p), (0, 0)))
    x2w = x2w.astype(compute_dtype)

    # f32 bias row (kept out of the matmul operands -> no bf16 double rounding).
    if bias is None:
        bias_row = jnp.zeros((1, 1, NO), jnp.float32)
    else:
        bias_row = jnp.tile(bias.astype(jnp.float32), L2).reshape(1, 1, NO)

    # ---- tile selection with a padding-aware VMEM model ---------------------
    if block_n is None:
        block_n = NO if NO <= 2048 else 2048      # lane tile (mult of 128 if < NO)
    if block_l1 is None:
        block_l1 = L1 if L1 <= 512 else 512       # big L1 tiles (v5e/v6e advice)

    def _footprint(bl1, bn):
        x1_b = _padded_vmem_bytes((1, bl1, D1r), compute_dtype)
        w_b = _padded_vmem_bytes((1, D1r, bn), compute_dtype)
        b_b = _padded_vmem_bytes((1, 1, bn), jnp.float32)
        o_b = _padded_vmem_bytes((1, bl1, bn), out_dtype)
        acc_b = _padded_vmem_bytes((bl1, bn), jnp.float32)
        return 2 * (x1_b + w_b + b_b + o_b) + acc_b    # 2x = double buffering

    for _ in range(64):
        if _footprint(block_l1, block_n) <= vmem_budget_bytes:
            break
        if block_l1 > 128:
            block_l1 = max(128, (block_l1 // 2) // 8 * 8)
        elif block_n > 128:
            block_n = max(128, (block_n // 2) // 128 * 128)
        elif block_l1 > 8:
            block_l1 = max(8, (block_l1 // 2) // 8 * 8)
        else:
            break
    block_l1 = min(block_l1, L1) if block_l1 >= L1 else block_l1
    footprint = _footprint(block_l1, block_n)
    vmem_limit = int(min(max(footprint + (2 << 20), 32 << 20), 110 << 20))

    n_t = pl.cdiv(L1, block_l1)
    n_n = pl.cdiv(NO, block_n)

    cesz = compute_dtype.itemsize
    cost = pl.CostEstimate(
        flops=2 * B * L1 * D1r * NO,
        transcendentals=0,
        bytes_accessed=(B * L1 * D1r * cesz + B * D1r * NO * cesz
                        + NO * 4 + B * L1 * NO * out_dtype.itemsize))

    out_flat = pl.pallas_call(
        _biaffine_kernel,
        out_shape=jax.ShapeDtypeStruct((B, L1, NO), out_dtype),
        grid_spec=pltpu.PrefetchScalarGridSpec(
            num_scalar_prefetch=0,
            grid=(B, n_n, n_t),          # L1 tiles innermost -> x2w stays resident
            in_specs=[
                pl.BlockSpec((1, block_l1, D1r), lambda b, n, t: (b, t, 0)),
                pl.BlockSpec((1, D1r, block_n), lambda b, n, t: (b, 0, n)),
                pl.BlockSpec((1, 1, block_n), lambda b, n, t: (0, 0, n)),
            ],
            out_specs=pl.BlockSpec((1, block_l1, block_n),
                                   lambda b, n, t: (b, t, n)),
        ),
        compiler_params=pltpu.CompilerParams(
            dimension_semantics=("parallel", "parallel", "parallel"),
            vmem_limit_bytes=vmem_limit),
        cost_estimate=cost,
    )(x1p, x2w, bias_row)

    # Metadata-only reshape to the PyTorch (B, L1, L2, O) layout.
    return out_flat.reshape(B, L1, L2, O)


def _biaffine_reference(input1, input2, weight, bias):
    B, L1, _ = input1.shape
    _, L2, _ = input2.shape
    x1 = jnp.concatenate([input1, jnp.ones((B, L1, 1), input1.dtype)], axis=2)
    x2 = jnp.concatenate([input2, jnp.ones((B, L2, 1), input2.dtype)], axis=2)
    return jnp.einsum("bip,pqo,bjq->bijo", x1, weight, x2,
                      precision=jax.lax.Precision.HIGHEST) + bias


if __name__ == "__main__":
    # Small deterministic setup.
    B, L1, L2 = 2, 8, 10
    in1_features, in2_features, out_features = 32, 24, 4

    key = jax.random.PRNGKey(0)
    k1, k2, k3, k4 = jax.random.split(key, 4)

    input1 = jax.random.normal(k1, (B, L1, in1_features), dtype=jnp.float32)
    input2 = jax.random.normal(k2, (B, L2, in2_features), dtype=jnp.float32)

    # NOTE: the PyTorch module's reset_parameters() zero-fills weight/bias,
    # which makes the forward trivially zero.  Use non-zero parameters of the
    # same shapes so the kernel actually computes something.
    weight = 0.05 * jax.random.normal(
        k3, (in1_features + 1, in2_features + 1, out_features), dtype=jnp.float32)
    bias = 0.1 * jax.random.normal(k4, (out_features,), dtype=jnp.float32)

    ref = _biaffine_reference(input1, input2, weight, bias)

    # float32 operands + float32 output (semantics-preserving default).
    fwd_f32 = jax.jit(biaffine_forward)
    out_f32 = jax.block_until_ready(fwd_f32(input1, input2, weight, bias))
    assert out_f32.shape == (B, L1, L2, out_features)
    assert out_f32.dtype == jnp.float32
    assert jnp.allclose(out_f32, ref, atol=2e-3, rtol=2e-3), "f32 mismatch vs reference"

    # bfloat16 matmul operands, f32 accumulation + f32 output.
    fwd_bf16 = jax.jit(partial(biaffine_forward, compute_dtype=jnp.bfloat16))
    out_bf16 = jax.block_until_ready(fwd_bf16(input1, input2, weight, bias))
    assert out_bf16.shape == (B, L1, L2, out_features)
    assert jnp.allclose(out_bf16, ref, atol=0.1, rtol=0.1), "bf16 mismatch vs reference"

    # Bandwidth-optimized path: bf16 operands AND bf16 output (halves HBM writes).
    fwd_bf16o = jax.jit(partial(biaffine_forward, compute_dtype=jnp.bfloat16,
                                out_dtype=jnp.bfloat16))
    out_b = jax.block_until_ready(fwd_bf16o(input1, input2, weight, bias))
    assert out_b.shape == (B, L1, L2, out_features)
    assert out_b.dtype == jnp.bfloat16
    assert jnp.allclose(out_b.astype(jnp.float32), ref, atol=0.15, rtol=0.15), \
        "bf16-out mismatch vs reference"

    print("KERNEL_OK")
</pallas_src>

<mosaic_0001>
module attributes {stable_mosaic.version = 11 : i64} {
  func.func @_biaffine_kernel(%arg0: i32, %arg1: i32, %arg2: i32, %arg3: memref<1x8x40xf32, #tpu.memory_space<vmem>>, %arg4: memref<1x40x40xf32, #tpu.memory_space<vmem>>, %arg5: memref<1x1x40xf32, #tpu.memory_space<vmem>>, %arg6: memref<1x8x40xf32, #tpu.memory_space<vmem>>) attributes {dimension_semantics = [#tpu.dimension_semantics<parallel>, #tpu.dimension_semantics<parallel>, #tpu.dimension_semantics<parallel>], iteration_bounds = array<i64: 2, 1, 1>, scalar_prefetch = 0 : i64, scratch_operands = 0 : i64, tpu.core_type = #tpu.core_type<tc>, window_params = [{transform_indices = @transform_0, window_bounds = array<i64: 1, 8, 40>}, {transform_indices = @transform_1, window_bounds = array<i64: 1, 40, 40>}, {transform_indices = @transform_2, window_bounds = array<i64: 1, 1, 40>}, {transform_indices = @transform_3, window_bounds = array<i64: 1, 8, 40>}]} {
    %c0 = arith.constant 0 : index
    %c0_0 = arith.constant 0 : index
    %c0_1 = arith.constant 0 : index
    %0 = vector.load %arg3[%c0, %c0_0, %c0_1] : memref<1x8x40xf32, #tpu.memory_space<vmem>>, vector<1x8x40xf32>
    %1 = vector.shape_cast %0 : vector<1x8x40xf32> to vector<8x40xf32>
    %c0_2 = arith.constant 0 : index
    %c0_3 = arith.constant 0 : index
    %c0_4 = arith.constant 0 : index
    %2 = vector.load %arg4[%c0_2, %c0_3, %c0_4] : memref<1x40x40xf32, #tpu.memory_space<vmem>>, vector<1x40x40xf32>
    %3 = vector.shape_cast %2 : vector<1x40x40xf32> to vector<40x40xf32>
    %cst = arith.constant dense<0.000000e+00> : vector<8x40xf32>
    %4 = tpu.matmul %1, %3, %cst {dimension_numbers = #tpu.dot_dimension_numbers<[1], [0], [0], [1], [0, 0, 1, 1], [], []>} : vector<8x40xf32>, vector<40x40xf32>, vector<8x40xf32> -> vector<8x40xf32>
    %c0_5 = arith.constant 0 : index
    %c0_6 = arith.constant 0 : index
    %c0_7 = arith.constant 0 : index
    %5 = vector.load %arg5[%c0_5, %c0_6, %c0_7] : memref<1x1x40xf32, #tpu.memory_space<vmem>>, vector<1x1x40xf32>
    %6 = vector.shape_cast %5 : vector<1x1x40xf32> to vector<1x40xf32>
    %7 = vector.broadcast %6 : vector<1x40xf32> to vector<8x40xf32>
    %8 = arith.addf %4, %7 : vector<8x40xf32>
    %c0_8 = arith.constant 0 : index
    %c0_9 = arith.constant 0 : index
    %c0_10 = arith.constant 0 : index
    %9 = vector.load %arg6[%c0_8, %c0_9, %c0_10] : memref<1x8x40xf32, #tpu.memory_space<vmem>>, vector<1x8x40xf32>
    %10 = vector.shape_cast %9 : vector<1x8x40xf32> to vector<8x40xf32>
    %11 = vector.shape_cast %8 : vector<8x40xf32> to vector<1x8x40xf32>
    tpu.vector_store %arg6[%c0_8, %c0_9, %c0_10], %11 {strides = array<i32>} : memref<1x8x40xf32, #tpu.memory_space<vmem>>, vector<1x8x40xf32>,
    return
  }
  func.func @transform_0(%arg0: i32, %arg1: i32, %arg2: i32) -> (i32, i32, i32) {
    %c0_i32 = arith.constant 0 : i32
    %c0_i32_0 = arith.constant 0 : i32
    return %arg0, %arg2, %c0_i32 : i32, i32, i32
  }
  func.func @transform_1(%arg0: i32, %arg1: i32, %arg2: i32) -> (i32, i32, i32) {
    %c0_i32 = arith.constant 0 : i32
    %c0_i32_0 = arith.constant 0 : i32
    return %arg0, %c0_i32, %arg1 : i32, i32, i32
  }
  func.func @transform_2(%arg0: i32, %arg1: i32, %arg2: i32) -> (i32, i32, i32) {
    %c0_i32 = arith.constant 0 : i32
    %c0_i32_0 = arith.constant 0 : i32
    %c0_i32_1 = arith.constant 0 : i32
    return %c0_i32, %c0_i32_0, %arg1 : i32, i32, i32
  }
  func.func @transform_3(%arg0: i32, %arg1: i32, %arg2: i32) -> (i32, i32, i32) {
    %c0_i32 = arith.constant 0 : i32
    return %arg0, %arg2, %arg1 : i32, i32, i32
  }
}

</mosaic_0001>

<llo_original>
// kernel: tile.8
$region0: #{tile.8}
  #allocation0 [shape = 's32[1]{0}', space=sflag, size = 0x4, scoped, tag = 'scoped memory for tile.8']
  %s0 = inlined_call_operand.vmem [shape: f32[4], index: 0, kind: input, shape index: {}]
  %s1 = inlined_call_operand.vmem [shape: f32[10,4], index: 1, kind: output, shape index: {}]
  // Predicated region
  $region2: #{tile.8} parent=0 // pred_check
    _
  $region3: #{tile.8} parent=0 // pred_check_branch
    %3 = sbr.rel (0) target = $region5
  $region4: #{tile.8} parent=0 // pred_region
    _
  $region5: #{tile.8} parent=0 // pred_fallthru
    _
  %v4 = vld [vmem:[%s0] ss:$0 sm:$0xff]
  %5 = vst [vmem:[%s1] sm:$0xff] %v4
  %s6 = scalar_lea.vmem %s1, 8
  %7 = vst [vmem:[%s6] sm:$0xff] %v4

// kernel: tile.9
$region0: #{tile.9}
  %s0 = inlined_call_operand.vmem [shape: f32[10,4], index: 0, kind: input, shape index: {}]
  %s1 = inlined_call_operand.vmem [shape: f32[1,1,40], index: 1, kind: output, shape index: {}]
  $region1: #{tile.9} parent=0
    #allocation0 [shape = 'u8[4096]{0}', space=vmem, size = 0x1000, scoped, tag = 'scoped mem for output reshape']
    %v2 = vld [vmem:[%s0] sm:$0x1]
    %vm3 = vcmask 31744
    %4 = vst.msk [vmem:[#allocation0] sm:$0x1] %vm3, %v2
    %s5 = scalar_lea.vmem %s0, 9
    %v6 = vld [vmem:[%s5] sm:$0x1]
    %7 = vrot.lane.b32.xlu0 %v6, 36
    %v8 = vpop.permute.xlu0 %7
    %vm9 = vcmask 326944
    %10 = vst.msk [vmem:[#allocation0] sm:$0x1] %vm9, %v8
    %s11 = scalar_lea.vmem %s0, 8
    %v12 = vld [vmem:[%s11] sm:$0x1]
    %13 = vrot.lane.b32.xlu0 %v12, 32
    %v14 = vpop.permute.xlu0 %13
    %vm15 = vcmask 294144
    %16 = vst.msk [vmem:[#allocation0] sm:$0x1] %vm15, %v14
    %s17 = scalar_lea.vmem %s0, 7
    %v18 = vld [vmem:[%s17] sm:$0x1]
    %19 = vrot.lane.b32.xlu0 %v18, 28
    %v20 = vpop.permute.xlu0 %19
    %vm21 = vcmask 261344
    %22 = vst.msk [vmem:[#allocation0] sm:$0x1] %vm21, %v20
    %s23 = scalar_lea.vmem %s0, 6
    %v24 = vld [vmem:[%s23] sm:$0x1]
    %25 = vrot.lane.b32.xlu0 %v24, 24
    %v26 = vpop.permute.xlu0 %25
    %vm27 = vcmask 228544
    %28 = vst.msk [vmem:[#allocation0] sm:$0x1] %vm27, %v26
    %s29 = scalar_lea.vmem %s0, 5
    %v30 = vld [vmem:[%s29] sm:$0x1]
    %31 = vrot.lane.b32.xlu0 %v30, 20
    %v32 = vpop.permute.xlu0 %31
    %vm33 = vcmask 195744
    %34 = vst.msk [vmem:[#allocation0] sm:$0x1] %vm33, %v32
    %s35 = scalar_lea.vmem %s0, 4
    %v36 = vld [vmem:[%s35] sm:$0x1]
    %37 = vrot.lane.b32.xlu0 %v36, 16
    %v38 = vpop.permute.xlu0 %37
    %vm39 = vcmask 162944
    %40 = vst.msk [vmem:[#allocation0] sm:$0x1] %vm39, %v38
    %s41 = scalar_lea.vmem %s0, 3
    %v42 = vld [vmem:[%s41] sm:$0x1]
    %43 = vrot.lane.b32.xlu0 %v42, 12
    %v44 = vpop.permute.xlu0 %43
    %vm45 = vcmask 130144
    %46 = vst.msk [vmem:[#allocation0] sm:$0x1] %vm45, %v44
    %s47 = scalar_lea.vmem %s0, 2
    %v48 = vld [vmem:[%s47] sm:$0x1]
    %49 = vrot.lane.b32.xlu0 %v48, 8
    %v50 = vpop.permute.xlu0 %49
    %vm51 = vcmask 97344
    %52 = vst.msk [vmem:[#allocation0] sm:$0x1] %vm51, %v50
    %s53 = scalar_lea.vmem %s0, 1
    %v54 = vld [vmem:[%s53] sm:$0x1]
    %55 = vrot.lane.b32.xlu0 %v54, 4
    %v56 = vpop.permute.xlu0 %55
    %vm57 = vcmask 64544
    %58 = vst.msk [vmem:[#allocation0] sm:$0x1] %vm57, %v56
    %s60 = sshllo.u32 0, 1
    %v62 = vld [vmem:[#allocation0] sm:%s60]
    %s63 = sshllo.u32 0, 1
    %64 = vst [vmem:[%s1] sm:%s63] %v62

// kernel: biaffine_forward.1
$region0: #{biaffine_forward.1}
  #allocation0 [shape = 'u32[]', space=smem, size = 0x4, offset = 0x4, fixed_abs, tag = 'smem constant byte address 0x4 - core index']
  #allocation1 [shape = 'u32[144,128]{1,0:T(1,128)}', space=vmem, size = 0x12000, scoped, tag = 'internal scratch']
  %s0 = inlined_call_operand.vmem [shape: f32[2,8,40], index: 0, kind: input, shape index: {}]
  %s1 = inlined_call_operand.vmem [shape: f32[2,40,40], index: 1, kind: input, shape index: {}]
  %s2 = inlined_call_operand.vmem [shape: f32[1,1,40], index: 2, kind: input, shape index: {}]
  %s3 = inlined_call_operand.vmem [shape: f32[2,8,40], index: 3, kind: output, shape index: {}]
  %s4 = sld [smem:[#allocation0]]
  $region45: #{biaffine_forward.1} parent=0
    _
  %s6 = ssub.s32 1, %s4
  %s7 = scalar_select 0, %s6, %s4
  loop: start=0, step=1, limit=4
  $region2: #{biaffine_forward.1} parent=0 // loop_pre_header
    _
  $region3: #{biaffine_forward.1} parent=0 // loop_header
    %s9 = sphi 0, %s13
    %p10 = scmp.ge.s32.totalorder %s9, 4
    %s16 = sphi 0, %s35
    %s17 = sphi 0, %s31
    %s18 = sphi 0, %s27
    %s19 = sphi 0, %s16
    %s20 = sphi 0, %s17
    %s21 = sphi 0, %s18
    %s22 = sphi 0, %s19
    %s23 = sphi 0, %s20
    %s24 = sphi 0, %s21
    %s40 = sphi 0, %s42
    %s43 = sphi 0, %s40
    %s44 = sphi 0, %s43
    %s60 = sphi 0, %s44
    %s68 = sphi 0, %s70
    %s71 = sphi 0, %s68
    %s72 = sphi 0, %s71
    %s88 = sphi 0, %s72
    %s94 = sphi 0, %s96
    %s97 = sphi 0, %s94
    %s98 = sphi 0, %s97
    %s114 = sphi 0, %s98
    %s124 = sphi 0, %s126
    %s127 = sphi 0, %s124
    %s128 = sphi 0, %s127
    %s144 = sphi 0, %s128
  $region4: #{biaffine_forward.1} parent=0 // loop_header_branch
    %12 = sbr.rel (%p10) target = $region8
  $region5: #{biaffine_forward.1} parent=0 // loop_body
    %s14 = ssub.s32 %s9, 1
    %s15 = ssub.s32 %s9, 2
    %s25 = sadd.s32 1, %s18
    %p26 = scmp.ge.s32.totalorder %s25, 1
    %s27 = scalar_select %p26, 0, %s25
    %s28 = sadd.s32 1, %s17
    %s29 = scalar_select %p26, %s28, %s17
    %p30 = scmp.ge.s32.totalorder %s29, 1
    %s31 = scalar_select %p30, 0, %s29
    %s32 = sadd.s32 1, %s16
    %s33 = scalar_select %p30, %s32, %s16
    %p34 = scmp.ge.s32.totalorder %s33, 2
    %s35 = scalar_select %p34, 0, %s33
    %s36 = ssub.s32 %s16, %s35
    %s37 = ssub.s32 %s18, %s27
    %s38 = sor.u32 %s36, %s37
    %p39 = scmp.eq.s32.totalorder %s38, 0
    %s41 = sadd.s32 %s40, 1
    %s42 = scalar_select %p39, %s40, %s41
    %p45 = pneg %p39
    %p46 = scmp.eq.s32.totalorder %s9, 1
    %p47 = por %p45, %p46
    %p48 = scmp.ne.s32.totalorder %s40, %s43
    %p49 = scmp.eq.s32.totalorder %s9, 0
    %p50 = por %p48, %p49
    %p51 = scmp.ne.s32.totalorder %s40, %s43
    %p52 = scmp.eq.s32.totalorder %s14, 1
    %p53 = por %p51, %p52
    %p54 = scmp.ne.s32.totalorder %s43, %s44
    %p55 = scmp.eq.s32.totalorder %s14, 0
    %p56 = por %p54, %p55
    %p57 = scmp.ne.s32.totalorder %s43, %s44
    %p58 = scmp.eq.s32.totalorder %s15, 1
    %p59 = por %p57, %p58
    %p61 = scmp.ne.s32.totalorder %s44, %s60
    %p62 = scmp.eq.s32.totalorder %s15, 0
    %p63 = por %p61, %p62
    %s64 = ssub.s32 %s16, %s35
    %s65 = ssub.s32 %s17, %s31
    %s66 = sor.u32 %s64, %s65
    %p67 = scmp.eq.s32.totalorder %s66, 0
    %s69 = sadd.s32 %s68, 1
    %s70 = scalar_select %p67, %s68, %s69
    %p73 = pneg %p67
    %p74 = scmp.eq.s32.totalorder %s9, 1
    %p75 = por %p73, %p74
    %p76 = scmp.ne.s32.totalorder %s68, %s71
    %p77 = scmp.eq.s32.totalorder %s9, 0
    %p78 = por %p76, %p77
    %p79 = scmp.ne.s32.totalorder %s68, %s71
    %p80 = scmp.eq.s32.totalorder %s14, 1
    %p81 = por %p79, %p80
    %p82 = scmp.ne.s32.totalorder %s71, %s72
    %p83 = scmp.eq.s32.totalorder %s14, 0
    %p84 = por %p82, %p83
    %p85 = scmp.ne.s32.totalorder %s71, %s72
    %p86 = scmp.eq.s32.totalorder %s15, 1
    %p87 = por %p85, %p86
    %p89 = scmp.ne.s32.totalorder %s72, %s88
    %p90 = scmp.eq.s32.totalorder %s15, 0
    %p91 = por %p89, %p90
    %s92 = ssub.s32 %s17, %s31
    %p93 = scmp.eq.s32.totalorder %s92, 0
    %s95 = sadd.s32 %s94, 1
    %s96 = scalar_select %p93, %s94, %s95
    %p99 = pneg %p93
    %p100 = scmp.eq.s32.totalorder %s9, 1
    %p101 = por %p99, %p100
    %p102 = scmp.ne.s32.totalorder %s94, %s97
    %p103 = scmp.eq.s32.totalorder %s9, 0
    %p104 = por %p102, %p103
    %p105 = scmp.ne.s32.totalorder %s94, %s97
    %p106 = scmp.eq.s32.totalorder %s14, 1
    %p107 = por %p105, %p106
    %p108 = scmp.ne.s32.totalorder %s97, %s98
    %p109 = scmp.eq.s32.totalorder %s14, 0
    %p110 = por %p108, %p109
    %p111 = scmp.ne.s32.totalorder %s97, %s98
    %p112 = scmp.eq.s32.totalorder %s15, 1
    %p113 = por %p111, %p112
    %p115 = scmp.ne.s32.totalorder %s98, %s114
    %p116 = scmp.eq.s32.totalorder %s15, 0
    %p117 = por %p115, %p116
    %s118 = ssub.s32 %s16, %s35
    %s119 = ssub.s32 %s18, %s27
    %s120 = sor.u32 %s118, %s119
    %s121 = ssub.s32 %s17, %s31
    %s122 = sor.u32 %s120, %s121
    %p123 = scmp.eq.s32.totalorder %s122, 0
    %s125 = sadd.s32 %s124, 1
    %s126 = scalar_select %p123, %s124, %s125
    %p129 = pneg %p123
    %p130 = scmp.eq.s32.totalorder %s9, 1
    %p131 = por %p129, %p130
    %p132 = scmp.ne.s32.totalorder %s124, %s127
    %p133 = scmp.eq.s32.totalorder %s9, 0
    %p134 = por %p132, %p133
    %p135 = scmp.ne.s32.totalorder %s124, %s127
    %p136 = scmp.eq.s32.totalorder %s14, 1
    %p137 = por %p135, %p136
    %p138 = scmp.ne.s32.totalorder %s127, %s128
    %p139 = scmp.eq.s32.totalorder %s14, 0
    %p140 = por %p138, %p139
    %p141 = scmp.ne.s32.totalorder %s127, %s128
    %p142 = scmp.eq.s32.totalorder %s15, 1
    %p143 = por %p141, %p142
    %p145 = scmp.ne.s32.totalorder %s128, %s144
    %p146 = scmp.eq.s32.totalorder %s15, 0
    %p147 = por %p145, %p146
    %p148 = scmp.le.s32.totalorder 1, %s9
    %p149 = scmp.lt.s32.totalorder %s9, 3
    %p150 = pnand %p148, %p149
    %p151 = pneg %p150
    // Predicated region
    $region9: #{biaffine_forward.1} parent=5 // pred_check
      _
    $region10: #{biaffine_forward.1} parent=5 // pred_check_branch
      %153 = sbr.rel (%p150) target = $region12
    $region11: #{biaffine_forward.1} parent=5 // pred_region
      %s154 = ssub.s32 %s9, 1
      // Predicated region
      $region13: #{biaffine_forward.1} parent=11 // pred_check
        %p155 = pneg %p110
      $region14: #{biaffine_forward.1} parent=11 // pred_check_branch
        %157 = sbr.rel (%p155) target = $region16
      $region15: #{biaffine_forward.1} parent=11 // pred_region
        %p158 = scmp.lt.s32.totalorder %s20, 0
        %s159 = scalar_select %p158, %s20, 0
        %s160 = scalar_lea.vmem %s2, %s159
      $region16: #{biaffine_forward.1} parent=11 // pred_fallthru
        _
    $region12: #{biaffine_forward.1} parent=5 // pred_fallthru
      _
    %p161 = scmp.lt.s32.totalorder %s9, 2
    // Predicated region
    $region17: #{biaffine_forward.1} parent=5 // pred_check
      %p162 = pneg %p161
    $region18: #{biaffine_forward.1} parent=5 // pred_check_branch
      %164 = sbr.rel (%p162) target = $region20
    $region19: #{biaffine_forward.1} parent=5 // pred_region
      // Predicated region
      $region21: #{biaffine_forward.1} parent=19 // pred_check
        %p165 = pneg %p50
      $region22: #{biaffine_forward.1} parent=19 // pred_check_branch
        %167 = sbr.rel (%p165) target = $region24
      $region23: #{biaffine_forward.1} parent=19 // pred_region
        %p168 = scmp.lt.s32.totalorder %s16, 1
        %s169 = scalar_select %p168, %s16, 1
        %p170 = scmp.lt.s32.totalorder %s18, 0
        %s171 = scalar_select %p170, %s18, 0
        %s172 = sadd.s32 %s171, %s169
        %s173 = smul.addr %s172, 8
        %s174 = scalar_lea.vmem %s0, %s173
      $region24: #{biaffine_forward.1} parent=19 // pred_fallthru
        _
      // Predicated region
      $region25: #{biaffine_forward.1} parent=19 // pred_check
        %p175 = pneg %p78
      $region26: #{biaffine_forward.1} parent=19 // pred_check_branch
        %177 = sbr.rel (%p175) target = $region28
      $region27: #{biaffine_forward.1} parent=19 // pred_region
        %p178 = scmp.lt.s32.totalorder %s16, 1
        %s179 = scalar_select %p178, %s16, 1
        %p180 = scmp.lt.s32.totalorder %s17, 0
        %s181 = scalar_select %p180, %s17, 0
        %s182 = smul.addr %s179, 5
        %s183 = sadd.s32 %s181, %s182
        %s184 = smul.addr %s183, 8
        %s185 = scalar_lea.vmem %s1, %s184
      $region28: #{biaffine_forward.1} parent=19 // pred_fallthru
        _
    $region20: #{biaffine_forward.1} parent=5 // pred_fallthru
      _
    %p186 = scmp.le.s32.totalorder 1, %s9
    %p187 = scmp.lt.s32.totalorder %s9, 3
    %p188 = pnand %p186, %p187
    %p189 = pneg %p188
    // Predicated region
    $region29: #{biaffine_forward.1} parent=5 // pred_check
      _
    $region30: #{biaffine_forward.1} parent=5 // pred_check_branch
      %191 = sbr.rel (%p188) target = $region32
    $region31: #{biaffine_forward.1} parent=5 // pred_region
      %s192 = ssub.s32 %s9, 1
      %p193 = scmp.lt.s32.totalorder %s19, 1
      %s194 = scalar_select %p193, %s19, 1
      %p195 = scmp.lt.s32.totalorder %s21, 0
      %s196 = scalar_select %p195, %s21, 0
      %s197 = sadd.s32 %s196, %s194
      %s198 = smul.addr %s197, 8
      %s199 = scalar_lea.vmem %s0, %s198
      %p200 = pneg %p56
      %p201 = pneg %p53
      %p202 = scmp.lt.s32.totalorder %s19, 1
      %s203 = scalar_select %p202, %s19, 1
      %p204 = scmp.lt.s32.totalorder %s20, 0
      %s205 = scalar_select %p204, %s20, 0
      %s206 = smul.addr %s203, 5
      %s207 = sadd.s32 %s205, %s206
      %s208 = smul.addr %s207, 8
      %s209 = scalar_lea.vmem %s1, %s208
      %p210 = pneg %p84
      %p211 = pneg %p81
      %p212 = scmp.lt.s32.totalorder %s20, 0
      %s213 = scalar_select %p212, %s20, 0
      %s214 = scalar_lea.vmem %s2, %s213
      %p215 = pneg %p110
      %p216 = pneg %p107
      %p217 = pneg %p140
      %p218 = pneg %p137
      %p219 = scmp.lt.s32.totalorder %s19, 1
      %s220 = scalar_select %p219, %s19, 1
      %p221 = scmp.lt.s32.totalorder %s21, 0
      %s222 = scalar_select %p221, %s21, 0
      %p223 = scmp.lt.s32.totalorder %s20, 0
      %s224 = scalar_select %p223, %s20, 0
      %s225 = sadd.s32 %s224, %s222
      %s226 = sadd.s32 %s225, %s220
      %s227 = smul.addr %s226, 8
      %s228 = scalar_lea.vmem %s3, %s227
      %p229 = scmp.lt.s32.totalorder %s19, 1
      %s230 = scalar_select %p229, %s19, 1
      %p231 = scmp.lt.s32.totalorder %s21, 0
      %s232 = scalar_select %p231, %s21, 0
      %s233 = sadd.s32 %s232, %s230
      %s234 = smul.addr %s233, 8
      %s235 = scalar_lea.vmem %s0, %s234
      %p236 = scmp.lt.s32.totalorder %s19, 1
      %s237 = scalar_select %p236, %s19, 1
      %p238 = scmp.lt.s32.totalorder %s20, 0
      %s239 = scalar_select %p238, %s20, 0
      %s240 = smul.addr %s237, 5
      %s241 = sadd.s32 %s239, %s240
      %s242 = smul.addr %s241, 8
      %s243 = scalar_lea.vmem %s1, %s242
      %p244 = scmp.lt.s32.totalorder %s20, 0
      %s245 = scalar_select %p244, %s20, 0
      %s246 = scalar_lea.vmem %s2, %s245
      %p247 = scmp.lt.s32.totalorder %s19, 1
      %s248 = scalar_select %p247, %s19, 1
      %p249 = scmp.lt.s32.totalorder %s21, 0
      %s250 = scalar_select %p249, %s21, 0
      %p251 = scmp.lt.s32.totalorder %s20, 0
      %s252 = scalar_select %p251, %s20, 0
      %s253 = sadd.s32 %s252, %s250
      %s254 = sadd.s32 %s253, %s248
      %s255 = smul.addr %s254, 8
      %s256 = scalar_lea.vmem %s3, %s255
      %v257 = vld [vmem:[%s235] sm:$0xff]
      %v258 = vld [vmem:[%s243] sm:$0xff]
      %v259 = vld [vmem:[%s243 + $0x8] sm:$0xff]
      %v260 = vld [vmem:[%s243 + $0x10] sm:$0xff]
      %v261 = vld [vmem:[%s243 + $0x18] sm:$0xff]
      %v262 = vld [vmem:[%s243 + $0x20] sm:$0xff]
      %v263 = vld [vmem:[%s246] sm:$0x1]
      %v265 = vlaneseq
      %v266 = vshrl.u32 %v265, 7
      %v267 = vsub.s32 0, %v266
      %v268 = vrot.slane %v263, %v267
      %vm270 = vcmask 326656
      %v272 = vsel %vm270, %v257, 0
      %274 = vmatprep.subr.mxu0 0.0
      %275 = vmatpush1.msra.mxu0 %v258
      %276 = vmatprep.subr.mxu0 0.0
      %277 = vmatpush1.msra.mxu0 %v259
      %278 = vmatprep.subr.mxu0 0.0
      %279 = vmatpush1.msra.mxu0 %v260
      %280 = vmatprep.subr.mxu0 0.0
      %281 = vmatpush1.msra.mxu0 %v261
      %282 = vmatprep.subr.mxu0 0.0
      %283 = vmatpush1.msra.mxu0 %v262
      %284 = vmatprep.subr.mxu0 0.0
      %285 = vmatpush1.msra.mxu0 0.0
      %286 = vmatprep.subr.mxu0 0.0
      %287 = vmatpush1.msra.mxu0 0.0
      %288 = vmatprep.subr.mxu0 0.0
      %289 = vmatpush1.msra.mxu0 0.0
      %290 = vmatprep.subr.mxu0 0.0
      %291 = vmatpush1.msra.mxu0 0.0
      %292 = vmatprep.subr.mxu0 0.0
      %293 = vmatpush1.msra.mxu0 0.0
      %294 = vmatprep.subr.mxu0 0.0
      %295 = vmatpush1.msra.mxu0 0.0
      %296 = vmatprep.subr.mxu0 0.0
      %297 = vmatpush1.msra.mxu0 0.0
      %298 = vmatprep.subr.mxu0 0.0
      %299 = vmatpush1.msra.mxu0 0.0
      %300 = vmatprep.subr.mxu0 0.0
      %301 = vmatpush1.msra.mxu0 0.0
      %302 = vmatprep.subr.mxu0 0.0
      %303 = vmatpush1.msra.mxu0 0.0
      %304 = vmatprep.subr.mxu0 0.0
      %305 = vmatpush1.msra.mxu0 0.0
      %306 = vmatprep.subr.mxu0 0.0
      %307 = vmatpush1.msra.mxu0 0.0
      %308 = vmatprep.subr.mxu0 0.0
      %309 = vmatpush1.msra.mxu0 0.0
      %310 = vmatprep.subr.mxu0 0.0
      %311 = vmatpush1.msra.mxu0 0.0
      %312 = vmatprep.subr.mxu0 0.0
      %313 = vmatpush1.msra.mxu0 0.0
      %314 = vmatprep.subr.mxu0 0.0
      %315 = vmatpush1.msra.mxu0 0.0
      %316 = vmatprep.subr.mxu0 0.0
      %317 = vmatpush1.msra.mxu0 0.0
      %318 = vmatprep.subr.mxu0 0.0
      %319 = vmatpush1.msra.mxu0 0.0
      %320 = vmatprep.subr.mxu0 0.0
      %321 = vmatpush1.msra.mxu0 0.0
      %322 = vmatprep.subr.mxu0 0.0
      %323 = vmatpush1.msra.mxu0 0.0
      %324 = vmatprep.subr.mxu0 0.0
      %325 = vmatpush1.msra.mxu0 0.0
      %326 = vmatprep.subr.mxu0 0.0
      %327 = vmatpush1.msra.mxu0 0.0
      %328 = vmatprep.subr.mxu0 0.0
      %329 = vmatpush1.msra.mxu0 0.0
      %330 = vmatprep.subr.mxu0 0.0
      %331 = vmatpush1.msra.mxu0 0.0
      %332 = vmatprep.subr.mxu0 0.0
      %333 = vmatpush1.msra.mxu0 0.0
      %334 = vmatprep.subr.mxu0 0.0
      %335 = vmatpush1.msra.mxu0 0.0
      %336 = vmatprep.subr.mxu0 0.0
      %337 = vmatpush1.msra.mxu0 0.0
      %338 = vmatprep.mubr.f32.mxu0 0.0
      %339 = vmatmul.mubr.f32.gmra.mrb[0].mxu0 %v272
      %v340 = vpop.f32.mrb[0].mxu0
      %v341 = vadd.f32 %v268, %v340
      %v342 = vpop.f32.mrb[0].mxu0
      %343 = vdwg.mxu0
      %344 = vst.msk [vmem:[%s256] sm:$0xff] %vm270, %v341
      %p345 = scmp.lt.s32.totalorder %s19, 1
      %s346 = scalar_select %p345, %s19, 1
      %p347 = scmp.lt.s32.totalorder %s21, 0
      %s348 = scalar_select %p347, %s21, 0
      %p349 = scmp.lt.s32.totalorder %s20, 0
      %s350 = scalar_select %p349, %s20, 0
      %s351 = sadd.s32 %s350, %s348
      %s352 = sadd.s32 %s351, %s346
      %s353 = smul.addr %s352, 8
      %s354 = scalar_lea.vmem %s3, %s353
      // Predicated region
      $region33: #{biaffine_forward.1} parent=31 // pred_check
        %p355 = pneg %p137
      $region34: #{biaffine_forward.1} parent=31 // pred_check_branch
        %357 = sbr.rel (%p355) target = $region36
      $region35: #{biaffine_forward.1} parent=31 // pred_region
        _
      $region36: #{biaffine_forward.1} parent=31 // pred_fallthru
        _
    $region32: #{biaffine_forward.1} parent=5 // pred_fallthru
      _
    %p358 = scmp.le.s32.totalorder 2, %s9
    // Predicated region
    $region37: #{biaffine_forward.1} parent=5 // pred_check
      %p359 = pneg %p358
    $region38: #{biaffine_forward.1} parent=5 // pred_check_branch
      %361 = sbr.rel (%p359) target = $region40
    $region39: #{biaffine_forward.1} parent=5 // pred_region
      %s362 = ssub.s32 %s9, 2
      // Predicated region
      $region41: #{biaffine_forward.1} parent=39 // pred_check
        %p363 = pneg %p143
      $region42: #{biaffine_forward.1} parent=39 // pred_check_branch
        %365 = sbr.rel (%p363) target = $region44
      $region43: #{biaffine_forward.1} parent=39 // pred_region
        %p366 = scmp.lt.s32.totalorder %s22, 1
        %s367 = scalar_select %p366, %s22, 1
        %p368 = scmp.lt.s32.totalorder %s24, 0
        %s369 = scalar_select %p368, %s24, 0
        %p370 = scmp.lt.s32.totalorder %s23, 0
        %s371 = scalar_select %p370, %s23, 0
        %s372 = sadd.s32 %s371, %s369
        %s373 = sadd.s32 %s372, %s367
        %s374 = smul.addr %s373, 8
        %s375 = scalar_lea.vmem %s3, %s374
      $region44: #{biaffine_forward.1} parent=39 // pred_fallthru
        _
    $region40: #{biaffine_forward.1} parent=5 // pred_fallthru
      _
  $region6: #{biaffine_forward.1} parent=0 // loop_footer
    %s13 = sadd.s32 1, %s9
  $region7: #{biaffine_forward.1} parent=0 // loop_footer_branch
    %8 = sbr.rel target = $region3
  $region8: #{biaffine_forward.1} parent=0 // loop_exit
    _

</llo_original>
